<compile_context>
chip_gen: v5e
topology: v5e:2x2
jax: 0.10.0
libtpu: 0.0.40
codegen_flags: <defaults>
</compile_context>

<pallas_src>
import math

import jax
import jax.numpy as jnp
import numpy as np
from jax.experimental import pallas as pl
from jax.experimental.pallas import tpu as pltpu

MU0 = 4.0 * math.pi * 1e-7

F_IN = 512          # flattened feature width expected by forward (x.view(-1, 512))
F_CAT = F_IN + 3    # 515 after concatenating the 3 plasma scalars
HID = 256


def plasma_dynamics_kernel(field_ref, x_ref, w1_ref, wb_ref, w2_ref, b2_ref, o_ref):
    """One row-tile: folded physics-scalar concat + Linear/ReLU/Linear/Tanh.

    field_ref : SMEM (2,)        f32  = [field_strength, field_gradient]
    x_ref     : VMEM (tm, 512)   f32
    w1_ref    : VMEM (512, 256)  bf16 -- W1[:, :512].T   (main weight)
    wb_ref    : VMEM (4, 256)    f32  -- row0=b1, rows1..3=coeff-scaled W1[:,512:515].T
    w2_ref    : VMEM (256, 512)  bf16 -- W2.T
    b2_ref    : VMEM (1, 512)    f32
    o_ref     : VMEM (tm, 512)   f32
    """
    s = field_ref[0]                      # magnetic field strength B
    g = field_ref[1]                      # magnetic field gradient
    inv_s2 = 1.0 / (s * s)                # the only per-call scalar divide left

    # torch.cat([x, alfven, beta, current], dim=1) @ W1.T  ==
    #   x @ W1[:, :512].T  +  (b1 + alfven*W1[:,512] + beta*W1[:,513] + J*W1[:,514]).T
    # with  alfven = B * 1/sqrt(mu0*rho),  beta = (2*mu0*P) / B^2,  J = grad / mu0.
    # The static coefficients are pre-multiplied into wb rows 1..3 (f32).
    extra_bias = (wb_ref[0:1, :]
                  + s * wb_ref[1:2, :]
                  + inv_s2 * wb_ref[2:3, :]
                  + g * wb_ref[3:4, :])                      # (1, 256) f32

    # dynamics_network: Linear -> ReLU -> (Dropout=identity) -> Linear -> Tanh
    xb = x_ref[...].astype(jnp.bfloat16)
    h = jnp.dot(xb, w1_ref[...], preferred_element_type=jnp.float32) + extra_bias
    h = jnp.maximum(h, 0.0)
    out = jnp.dot(h.astype(jnp.bfloat16), w2_ref[...],
                  preferred_element_type=jnp.float32) + b2_ref[...]
    o_ref[...] = jnp.tanh(out).astype(o_ref.dtype)


def prepare_params(raw):
    """One-time layout/cast of the Linear weights into the kernel's format.

    Do this once (e.g. at model load) and reuse across calls -- the per-call
    wrapper performs no weight transposes/pads/casts and no physics-coefficient
    math (density / pressure are static module parameters).
    """
    mu0 = jnp.float32(MU0)
    density = jnp.float32(raw["density"])
    pressure = jnp.float32(raw["pressure"])

    alfven_coeff = jax.lax.rsqrt(mu0 * density)   # VA   = B * alfven_coeff
    beta_coeff = 2.0 * mu0 * pressure             # beta = beta_coeff / B^2
    inv_mu0 = 1.0 / mu0                           # J    = grad * inv_mu0

    w1 = jnp.asarray(raw["w1"], jnp.float32)      # (256, 515)
    wb = jnp.stack(
        [jnp.asarray(raw["b1"], jnp.float32),     # row 0: bias
         alfven_coeff * w1[:, F_IN + 0],          # row 1: * strength
         beta_coeff * w1[:, F_IN + 1],            # row 2: * 1/strength^2
         inv_mu0 * w1[:, F_IN + 2]],              # row 3: * gradient
        axis=0)                                   # (4, 256) f32

    return {
        "w1t": w1[:, :F_IN].T.astype(jnp.bfloat16),                      # (512, 256) bf16
        "wb": wb,                                                        # (4, 256)   f32
        "w2t": jnp.asarray(raw["w2"], jnp.float32).T.astype(jnp.bfloat16),  # (256, 512) bf16
        "b2": jnp.asarray(raw["b2"], jnp.float32).reshape(1, F_IN),      # (1, 512)   f32
    }


def _row_tile_cap():
    """Generation-aware M-tile cap (activation double-buffering sets the limit)."""
    try:
        kind = jax.devices()[0].device_kind.lower()
    except Exception:
        return 512
    if "v5" in kind:
        return 512     # 16 MiB default scoped VMEM
    if "v7" in kind:
        return 2048    # 64 MiB physical / 32 MiB default scoped VMEM
    return 1024        # v6e and others (128 MiB VMEM)


def plasma_dynamics_forward(x, field, prep, *, tile_rows=None):
    """Wrapper: minimal glue (reshape + scalar cast) + gridded pallas_call.

    x     : any shape whose trailing dims flatten to multiples of 512
    field : (2,) array = [field_strength, field_gradient]
    prep  : output of prepare_params()
    """
    orig_shape = x.shape
    x2d = x.reshape(-1, F_IN).astype(jnp.float32)
    b = x2d.shape[0]
    field = jnp.asarray(field, jnp.float32).reshape(2)

    cap = tile_rows or _row_tile_cap()
    if b <= cap:
        tile_m, b_pad = b, b                       # single full-array tile, no padding
    else:
        tile_m = cap
        b_pad = ((b + tile_m - 1) // tile_m) * tile_m
        if b_pad != b:
            x2d = jnp.pad(x2d, ((0, b_pad - b), (0, 0)))
    num_tiles = b_pad // tile_m

    weight_bytes = (F_IN * HID * 2) + (HID * F_IN * 2) + (4 * HID * 4) + (F_IN * 4) + 8
    cost = pl.CostEstimate(
        flops=2 * b_pad * (F_IN * HID + HID * F_IN),
        transcendentals=b_pad * F_IN,                       # tanh
        bytes_accessed=weight_bytes + 2 * b_pad * F_IN * 4, # x in + out (f32)
    )

    out = pl.pallas_call(
        plasma_dynamics_kernel,
        out_shape=jax.ShapeDtypeStruct((b_pad, F_IN), jnp.float32),
        grid_spec=pltpu.PrefetchScalarGridSpec(
            num_scalar_prefetch=0,
            grid=(num_tiles,),
            in_specs=[
                pl.BlockSpec(memory_space=pltpu.MemorySpace.SMEM),       # field scalars
                pl.BlockSpec((tile_m, F_IN), lambda i: (i, 0)),          # x row-tile
                pl.BlockSpec((F_IN, HID), lambda i: (0, 0)),             # W1^T (resident)
                pl.BlockSpec((4, HID), lambda i: (0, 0)),                # bias + scalar rows
                pl.BlockSpec((HID, F_IN), lambda i: (0, 0)),             # W2^T (resident)
                pl.BlockSpec((1, F_IN), lambda i: (0, 0)),               # b2
            ],
            out_specs=pl.BlockSpec((tile_m, F_IN), lambda i: (i, 0)),
        ),
        compiler_params=pltpu.CompilerParams(dimension_semantics=("parallel",)),
        cost_estimate=cost,
    )(field, x2d, prep["w1t"], prep["wb"], prep["w2t"], prep["b2"])

    if b_pad != b:
        out = out[:b]
    return out.reshape(orig_shape)


def reference_forward(x, field, prep):
    """Pure-JAX reference mirroring the PyTorch forward semantics.

    Uses the same bf16-stored weights and the same (algebraically identical)
    fold of the 3 concatenated scalars into a first-layer bias, with f32
    accumulation -- i.e. torch's cat([x, alfven, beta, J]) @ W1.T semantics
    modulo the deliberate bf16 weight quantization.
    """
    x2d = x.reshape(-1, F_IN).astype(jnp.float32)
    s = jnp.float32(field[0])
    g = jnp.float32(field[1])
    wb = prep["wb"]
    extra = wb[0:1] + s * wb[1:2] + (1.0 / (s * s)) * wb[2:3] + g * wb[3:4]

    xb = x2d.astype(jnp.bfloat16).astype(jnp.float32)
    h = jnp.maximum(xb @ prep["w1t"].astype(jnp.float32) + extra, 0.0)
    hb = h.astype(jnp.bfloat16).astype(jnp.float32)
    out = jnp.tanh(hb @ prep["w2t"].astype(jnp.float32) + prep["b2"])
    return out.reshape(x.shape)


def init_params():
    key = jax.random.PRNGKey(0)
    k1, k2, k3, k4 = jax.random.split(key, 4)
    # Deterministic synthetic init (uniform, Linear-like scale).
    lim1 = 1.0 / math.sqrt(F_CAT)
    lim2 = 1.0 / math.sqrt(HID)
    return {
        "w1": jax.random.uniform(k1, (HID, F_CAT), jnp.float32, -lim1, lim1),
        "b1": jax.random.uniform(k2, (HID,), jnp.float32, -lim1, lim1),
        "w2": jax.random.uniform(k3, (F_IN, HID), jnp.float32, -lim2, lim2),
        "b2": jax.random.uniform(k4, (F_IN,), jnp.float32, -lim2, lim2),
        # PlasmaConfig defaults (synthetic, deterministic).
        "temperature": jnp.float32(1.0e6),
        "density": jnp.float32(1.0e-3),
        "pressure": jnp.float32(0.5),
        "conductivity": jnp.float32(1.0e3),
    }


if __name__ == "__main__":
    raw_params = init_params()
    prep = prepare_params(raw_params)        # one-time weight layout / bf16 cast

    key = jax.random.PRNGKey(0)
    kx, _ = jax.random.split(key)
    x = jax.random.normal(kx, (2, F_IN), jnp.float32)        # batch=2, hidden=512
    field = jnp.array([0.05, 1.0e-4], jnp.float32)           # [strength, gradient]

    fwd = jax.jit(plasma_dynamics_forward)
    out = jax.block_until_ready(fwd(x, field, prep))

    ref = reference_forward(x, field, prep)
    np.testing.assert_allclose(np.asarray(out), np.asarray(ref), rtol=2e-4, atol=2e-4)

    assert out.shape == x.shape and out.dtype == jnp.float32
    print("KERNEL_OK")
</pallas_src>

<mosaic_0001>
module attributes {stable_mosaic.version = 11 : i64} {
  func.func @plasma_dynamics_kernel(%arg0: i32, %arg1: memref<2xf32, #tpu.memory_space<smem>>, %arg2: memref<2x512xf32, #tpu.memory_space<vmem>>, %arg3: memref<512x256xbf16, #tpu.memory_space<vmem>>, %arg4: memref<4x256xf32, #tpu.memory_space<vmem>>, %arg5: memref<256x512xbf16, #tpu.memory_space<vmem>>, %arg6: memref<1x512xf32, #tpu.memory_space<vmem>>, %arg7: memref<2x512xf32, #tpu.memory_space<vmem>>) attributes {dimension_semantics = [#tpu.dimension_semantics<parallel>], iteration_bounds = array<i64: 1>, scalar_prefetch = 0 : i64, scratch_operands = 0 : i64, tpu.core_type = #tpu.core_type<tc>, window_params = [{transform_indices = @transform_0, window_bounds = array<i64: 2>}, {transform_indices = @transform_1, window_bounds = array<i64: 2, 512>}, {pipeline_mode = #tpu.pipeline_mode<synchronous>, transform_indices = @transform_2, window_bounds = array<i64: 512, 256>}, {pipeline_mode = #tpu.pipeline_mode<synchronous>, transform_indices = @transform_3, window_bounds = array<i64: 4, 256>}, {pipeline_mode = #tpu.pipeline_mode<synchronous>, transform_indices = @transform_4, window_bounds = array<i64: 256, 512>}, {pipeline_mode = #tpu.pipeline_mode<synchronous>, transform_indices = @transform_5, window_bounds = array<i64: 1, 512>}, {transform_indices = @transform_6, window_bounds = array<i64: 2, 512>}]} {
    %c0 = arith.constant 0 : index
    %0 = memref.load %arg1[%c0] : memref<2xf32, #tpu.memory_space<smem>>
    %c1 = arith.constant 1 : index
    %1 = memref.load %arg1[%c1] : memref<2xf32, #tpu.memory_space<smem>>
    %2 = arith.mulf %0, %0 : f32
    %cst = arith.constant 1.000000e+00 : f32
    %3 = arith.divf %cst, %2 : f32
    %c0_0 = arith.constant 0 : index
    %c0_1 = arith.constant 0 : index
    %4 = vector.load %arg4[%c0_0, %c0_1] : memref<4x256xf32, #tpu.memory_space<vmem>>, vector<1x256xf32>
    %c1_2 = arith.constant 1 : index
    %c0_3 = arith.constant 0 : index
    %5 = vector.load %arg4[%c1_2, %c0_3] : memref<4x256xf32, #tpu.memory_space<vmem>>, vector<1x256xf32>
    %6 = vector.broadcast %0 : f32 to vector<1x256xf32>
    %7 = arith.mulf %6, %5 : vector<1x256xf32>
    %8 = arith.addf %4, %7 : vector<1x256xf32>
    %c2 = arith.constant 2 : index
    %c0_4 = arith.constant 0 : index
    %9 = vector.load %arg4[%c2, %c0_4] : memref<4x256xf32, #tpu.memory_space<vmem>>, vector<1x256xf32>
    %10 = vector.broadcast %3 : f32 to vector<1x256xf32>
    %11 = arith.mulf %10, %9 : vector<1x256xf32>
    %12 = arith.addf %8, %11 : vector<1x256xf32>
    %c3 = arith.constant 3 : index
    %c0_5 = arith.constant 0 : index
    %13 = vector.load %arg4[%c3, %c0_5] : memref<4x256xf32, #tpu.memory_space<vmem>>, vector<1x256xf32>
    %14 = vector.broadcast %1 : f32 to vector<1x256xf32>
    %15 = arith.mulf %14, %13 : vector<1x256xf32>
    %16 = arith.addf %12, %15 : vector<1x256xf32>
    %c0_6 = arith.constant 0 : index
    %c0_7 = arith.constant 0 : index
    %17 = vector.load %arg2[%c0_6, %c0_7] : memref<2x512xf32, #tpu.memory_space<vmem>>, vector<2x512xf32>
    %18 = arith.truncf %17 : vector<2x512xf32> to vector<2x512xbf16>
    %c0_8 = arith.constant 0 : index
    %c0_9 = arith.constant 0 : index
    %19 = vector.load %arg3[%c0_8, %c0_9] : memref<512x256xbf16, #tpu.memory_space<vmem>>, vector<512x256xbf16>
    %cst_10 = arith.constant dense<0.000000e+00> : vector<2x256xf32>
    %20 = tpu.matmul %18, %19, %cst_10 {dimension_numbers = #tpu.dot_dimension_numbers<[1], [0], [0], [1], [0, 0, 1, 1], [], []>} : vector<2x512xbf16>, vector<512x256xbf16>, vector<2x256xf32> -> vector<2x256xf32>
    %21 = vector.broadcast %16 : vector<1x256xf32> to vector<2x256xf32>
    %22 = arith.addf %20, %21 : vector<2x256xf32>
    %cst_11 = arith.constant 0.000000e+00 : f32
    %23 = vector.broadcast %cst_11 : f32 to vector<2x256xf32>
    %24 = arith.maximumf %22, %23 : vector<2x256xf32>
    %25 = arith.truncf %24 : vector<2x256xf32> to vector<2x256xbf16>
    %c0_12 = arith.constant 0 : index
    %c0_13 = arith.constant 0 : index
    %26 = vector.load %arg5[%c0_12, %c0_13] : memref<256x512xbf16, #tpu.memory_space<vmem>>, vector<256x512xbf16>
    %cst_14 = arith.constant dense<0.000000e+00> : vector<2x512xf32>
    %27 = tpu.matmul %25, %26, %cst_14 {dimension_numbers = #tpu.dot_dimension_numbers<[1], [0], [0], [1], [0, 0, 1, 1], [], []>} : vector<2x256xbf16>, vector<256x512xbf16>, vector<2x512xf32> -> vector<2x512xf32>
    %c0_15 = arith.constant 0 : index
    %c0_16 = arith.constant 0 : index
    %28 = vector.load %arg6[%c0_15, %c0_16] : memref<1x512xf32, #tpu.memory_space<vmem>>, vector<1x512xf32>
    %29 = vector.broadcast %28 : vector<1x512xf32> to vector<2x512xf32>
    %30 = arith.addf %27, %29 : vector<2x512xf32>
    %31 = math.tanh %30 : vector<2x512xf32>
    %c0_17 = arith.constant 0 : index
    %c0_18 = arith.constant 0 : index
    %32 = vector.load %arg7[%c0_17, %c0_18] : memref<2x512xf32, #tpu.memory_space<vmem>>, vector<2x512xf32>
    tpu.vector_store %arg7[%c0_17, %c0_18], %31 {strides = array<i32>} : memref<2x512xf32, #tpu.memory_space<vmem>>, vector<2x512xf32>,
    return
  }
  func.func @transform_0(%arg0: i32) -> i32 {
    %c0_i32 = arith.constant 0 : i32
    %c0_i32_0 = arith.constant 0 : i32
    return %c0_i32 : i32
  }
  func.func @transform_1(%arg0: i32) -> (i32, i32) {
    %c0_i32 = arith.constant 0 : i32
    %c0_i32_0 = arith.constant 0 : i32
    return %arg0, %c0_i32 : i32, i32
  }
  func.func @transform_2(%arg0: i32) -> (i32, i32) {
    %c0_i32 = arith.constant 0 : i32
    %c0_i32_0 = arith.constant 0 : i32
    %c0_i32_1 = arith.constant 0 : i32
    return %c0_i32, %c0_i32_0 : i32, i32
  }
  func.func @transform_3(%arg0: i32) -> (i32, i32) {
    %c0_i32 = arith.constant 0 : i32
    %c0_i32_0 = arith.constant 0 : i32
    %c0_i32_1 = arith.constant 0 : i32
    return %c0_i32, %c0_i32_0 : i32, i32
  }
  func.func @transform_4(%arg0: i32) -> (i32, i32) {
    %c0_i32 = arith.constant 0 : i32
    %c0_i32_0 = arith.constant 0 : i32
    %c0_i32_1 = arith.constant 0 : i32
    return %c0_i32, %c0_i32_0 : i32, i32
  }
  func.func @transform_5(%arg0: i32) -> (i32, i32) {
    %c0_i32 = arith.constant 0 : i32
    %c0_i32_0 = arith.constant 0 : i32
    %c0_i32_1 = arith.constant 0 : i32
    return %c0_i32, %c0_i32_0 : i32, i32
  }
  func.func @transform_6(%arg0: i32) -> (i32, i32) {
    %c0_i32 = arith.constant 0 : i32
    %c0_i32_0 = arith.constant 0 : i32
    return %arg0, %c0_i32 : i32, i32
  }
}

</mosaic_0001>

<llo_original>
// kernel: plasma_dynamics_forward.1
$region0: #{plasma_dynamics_forward.1}
  #allocation0 [shape = 'u32[]', space=smem, size = 0x4, offset = 0x4, fixed_abs, tag = 'smem constant byte address 0x4 - core index']
  #allocation1 [shape = 'u32[72,128]{1,0:T(1,128)}', space=vmem, size = 0x9000, scoped, tag = 'internal scratch']
  %s0 = inlined_call_operand.hbm [shape: f32[2], index: 0, kind: input, shape index: {}]
  %s1 = inlined_call_operand.hbm [shape: f32[2,512], index: 1, kind: input, shape index: {}]
  %s2 = inlined_call_operand.hbm [shape: bf16[512,256], index: 2, kind: input, shape index: {}]
  %s3 = inlined_call_operand.hbm [shape: f32[4,256], index: 3, kind: input, shape index: {}]
  %s4 = inlined_call_operand.hbm [shape: bf16[256,512], index: 4, kind: input, shape index: {}]
  %s5 = inlined_call_operand.hbm [shape: f32[1,512], index: 5, kind: input, shape index: {}]
  %s6 = inlined_call_operand.hbm [shape: f32[2,512], index: 6, kind: output, shape index: {}]
  %s7 = sld [smem:[#allocation0]]
  $region58: #{plasma_dynamics_forward.1} parent=0
    _
  %s9 = ssub.s32 1, %s7
  %s10 = scalar_select 0, %s9, %s7
  $region1: #{plasma_dynamics_forward.1} parent=0
    #allocation2 [shape = 'u8[512]{0}', space=smem, size = 0x200, scoped, tag = 'input window, operand 0, single buffered']
    #allocation3 [shape = 's32[1]{0}', space=sflag, size = 0x4, scoped, tag = 'scoped memory for plasma_dynamics_forward.1']
    #allocation4 [shape = 's32[1]{0}', space=sflag, size = 0x4, scoped, tag = 'scoped memory for plasma_dynamics_forward.1']
    #allocation5 [shape = 's32[1]{0}', space=sflag, size = 0x4, scoped, tag = 'scoped memory for plasma_dynamics_forward.1']
    #allocation6 [shape = 'u8[4096]{0}', space=vmem, size = 0x1000, scoped, tag = 'input window, operand 1, single buffered']
    #allocation7 [shape = 'u8[262144]{0}', space=vmem, size = 0x40000, scoped, tag = 'input window, operand 2, single buffered']
    #allocation8 [shape = 's32[1]{0}', space=sflag, size = 0x4, scoped, tag = 'scoped memory for plasma_dynamics_forward.1']
    #allocation9 [shape = 'u8[4096]{0}', space=vmem, size = 0x1000, scoped, tag = 'input window, operand 3, single buffered']
    #allocation10 [shape = 'u8[262144]{0}', space=vmem, size = 0x40000, scoped, tag = 'input window, operand 4, single buffered']
    #allocation11 [shape = 's32[1]{0}', space=sflag, size = 0x4, scoped, tag = 'scoped memory for plasma_dynamics_forward.1']
    #allocation12 [shape = 'u8[2048]{0}', space=vmem, size = 0x800, scoped, tag = 'input window, operand 5, single buffered']
    #allocation13 [shape = 'u8[4096]{0}', space=vmem, size = 0x1000, scoped, tag = 'output window, operand 0, single buffered']
    %11 = vsyncpa [#allocation5], 0
    %12 = vsyncpa [#allocation3], 0
    %13 = vsyncpa [#allocation8], 0
    %14 = vsyncpa [#allocation11], 0
    %15 = vsyncpa [#allocation4], 0
    // Predicated region
    $region2: #{plasma_dynamics_forward.1} parent=1 // pred_check
      _
    $region3: #{plasma_dynamics_forward.1} parent=1 // pred_check_branch
      %17 = sbr.rel (0) target = $region5
    $region4: #{plasma_dynamics_forward.1} parent=1 // pred_region
      %19 = vsyncadd [#allocation5], 0
      %s21 = sshll.u32 %s0, 4
      %s22 = int_to_ptr.hbm [resolvable:$true] %s21
      %24 = dma.hbm_to_smem %s22, 16, [#allocation2], [#allocation5]
    $region5: #{plasma_dynamics_forward.1} parent=1 // pred_fallthru
      _
    // Predicated region
    $region6: #{plasma_dynamics_forward.1} parent=1 // pred_check
      _
    $region7: #{plasma_dynamics_forward.1} parent=1 // pred_check_branch
      %26 = sbr.rel (0) target = $region9
    $region8: #{plasma_dynamics_forward.1} parent=1 // pred_region
      %28 = vsyncadd [#allocation3], 0
      %s30 = sshll.u32 %s1, 4
      %s31 = int_to_ptr.hbm [resolvable:$true] %s30
      %s32 = sshll.u32 [#allocation6], 4
      %s33 = int_to_ptr.vmem [resolvable:$true] %s32
      %35 = dma.hbm_to_vmem [thread:$0]  %s31, 128, %s33, [#allocation3]
    $region9: #{plasma_dynamics_forward.1} parent=1 // pred_fallthru
      _
    // Predicated region
    $region10: #{plasma_dynamics_forward.1} parent=1 // pred_check
      _
    $region11: #{plasma_dynamics_forward.1} parent=1 // pred_check_branch
      %37 = sbr.rel (0) target = $region13
    $region12: #{plasma_dynamics_forward.1} parent=1 // pred_region
      %39 = vsyncadd [#allocation8], 0
      %s40 = sshll.u32 %s2, 4
      %s41 = int_to_ptr.hbm [resolvable:$true] %s40
      %s42 = sshll.u32 [#allocation7], 4
      %s43 = int_to_ptr.vmem [resolvable:$true] %s42
      %48 = dma.hbm_to_vmem [thread:$0]  %s41, 8192, %s43, [#allocation8], 128, 128, 8
    $region13: #{plasma_dynamics_forward.1} parent=1 // pred_fallthru
      _
    // Predicated region
    $region14: #{plasma_dynamics_forward.1} parent=1 // pred_check
      _
    $region15: #{plasma_dynamics_forward.1} parent=1 // pred_check_branch
      %50 = sbr.rel (0) target = $region17
    $region16: #{plasma_dynamics_forward.1} parent=1 // pred_region
      %52 = vsyncadd [#allocation8], 0
      %s54 = sshll.u32 %s3, 4
      %s55 = int_to_ptr.hbm [resolvable:$true] %s54
      %s56 = sshll.u32 [#allocation9], 4
      %s57 = int_to_ptr.vmem [resolvable:$true] %s56
      %59 = dma.hbm_to_vmem [thread:$0]  %s55, 128, %s57, [#allocation8]
    $region17: #{plasma_dynamics_forward.1} parent=1 // pred_fallthru
      _
    // Predicated region
    $region18: #{plasma_dynamics_forward.1} parent=1 // pred_check
      _
    $region19: #{plasma_dynamics_forward.1} parent=1 // pred_check_branch
      %61 = sbr.rel (0) target = $region21
    $region20: #{plasma_dynamics_forward.1} parent=1 // pred_region
      %63 = vsyncadd [#allocation11], 0
      %s64 = sshll.u32 %s4, 4
      %s65 = int_to_ptr.hbm [resolvable:$true] %s64
      %s66 = sshll.u32 [#allocation10], 4
      %s67 = int_to_ptr.vmem [resolvable:$true] %s66
      %72 = dma.hbm_to_vmem [thread:$0]  %s65, 8192, %s67, [#allocation11], 256, 256, 16
    $region21: #{plasma_dynamics_forward.1} parent=1 // pred_fallthru
      _
    // Predicated region
    $region22: #{plasma_dynamics_forward.1} parent=1 // pred_check
      _
    $region23: #{plasma_dynamics_forward.1} parent=1 // pred_check_branch
      %74 = sbr.rel (0) target = $region25
    $region24: #{plasma_dynamics_forward.1} parent=1 // pred_region
      %76 = vsyncadd [#allocation11], 0
      %s78 = sshll.u32 %s5, 4
      %s79 = int_to_ptr.hbm [resolvable:$true] %s78
      %s80 = sshll.u32 [#allocation12], 4
      %s81 = int_to_ptr.vmem [resolvable:$true] %s80
      %83 = dma.hbm_to_vmem [thread:$0]  %s79, 64, %s81, [#allocation11]
    $region25: #{plasma_dynamics_forward.1} parent=1 // pred_fallthru
      _
    // Predicated region
    $region26: #{plasma_dynamics_forward.1} parent=1 // pred_check
      _
    $region27: #{plasma_dynamics_forward.1} parent=1 // pred_check_branch
      %85 = sbr.rel (0) target = $region29
    $region28: #{plasma_dynamics_forward.1} parent=1 // pred_region
      %87 = dma.done [#allocation5], 16
    $region29: #{plasma_dynamics_forward.1} parent=1 // pred_fallthru
      _
    // Predicated region
    $region30: #{plasma_dynamics_forward.1} parent=1 // pred_check
      _
    $region31: #{plasma_dynamics_forward.1} parent=1 // pred_check_branch
      %89 = sbr.rel (0) target = $region33
    $region32: #{plasma_dynamics_forward.1} parent=1 // pred_region
      %91 = dma.done [#allocation3], 128
    $region33: #{plasma_dynamics_forward.1} parent=1 // pred_fallthru
      _
    // Predicated region
    $region34: #{plasma_dynamics_forward.1} parent=1 // pred_check
      _
    $region35: #{plasma_dynamics_forward.1} parent=1 // pred_check_branch
      %93 = sbr.rel (0) target = $region37
    $region36: #{plasma_dynamics_forward.1} parent=1 // pred_region
      %95 = dma.done [#allocation8], 8192
    $region37: #{plasma_dynamics_forward.1} parent=1 // pred_fallthru
      _
    // Predicated region
    $region38: #{plasma_dynamics_forward.1} parent=1 // pred_check
      _
    $region39: #{plasma_dynamics_forward.1} parent=1 // pred_check_branch
      %97 = sbr.rel (0) target = $region41
    $region40: #{plasma_dynamics_forward.1} parent=1 // pred_region
      %99 = dma.done [#allocation8], 128
    $region41: #{plasma_dynamics_forward.1} parent=1 // pred_fallthru
      _
    // Predicated region
    $region42: #{plasma_dynamics_forward.1} parent=1 // pred_check
      _
    $region43: #{plasma_dynamics_forward.1} parent=1 // pred_check_branch
      %101 = sbr.rel (0) target = $region45
    $region44: #{plasma_dynamics_forward.1} parent=1 // pred_region
      %103 = dma.done [#allocation11], 8192
    $region45: #{plasma_dynamics_forward.1} parent=1 // pred_fallthru
      _
    // Predicated region
    $region46: #{plasma_dynamics_forward.1} parent=1 // pred_check
      _
    $region47: #{plasma_dynamics_forward.1} parent=1 // pred_check_branch
      %105 = sbr.rel (0) target = $region49
    $region48: #{plasma_dynamics_forward.1} parent=1 // pred_region
      %107 = dma.done [#allocation11], 64
    $region49: #{plasma_dynamics_forward.1} parent=1 // pred_fallthru
      _
    %108 = sfence
    %s109 = sld [smem:[#allocation2]]
    %s110 = sld [smem:[#allocation2 + $0x1]]
    %s111 = smul.f32 %s109, %s109
    %v112 = vstv %s111
    %v113 = vrcp.pop %v112
    %v114 = vmul.f32 %v112, %v113
    %v115 = vsub.f32 1.0, %v114
    %v116 = vmul.f32 %v113, %v115
    %v117 = vadd.f32 %v113, %v116
    %vm118 = vweird.f32 %v112
    %vm119 = vweird.f32 %v113
    %vm120 = vmor %vm118, %vm119
    %v121 = vsel %vm120, %v113, %v117
    %v122 = vand.u32 2147483647, %v112
    %vm123 = vcmp.eq.f32.partialorder %v122, 8.507059e+37
    %v124 = vand.u32 %v112, 2147483648
    %v125 = vor.u32 1.1754944e-38, %v124
    %v126 = vsel %vm123, %v125, %v121
    %s127 = vtos %v126
    %v128 = vld [vmem:[#allocation9] ss:$4 sm:$0x3]
    %s129 = scalar_lea.vmem [#allocation9], 1
    %v130 = vld [vmem:[%s129] ss:$4 sm:$0x3]
    %v131 = vstv %s109
    %v132 = vmul.f32 %v131, %v130
    %v133 = vadd.f32 %v128, %v132
    %s134 = scalar_lea.vmem [#allocation9], 2
    %v135 = vld [vmem:[%s134] ss:$4 sm:$0x3]
    %v136 = vstv %s127
    %v137 = vmul.f32 %v136, %v135
    %v138 = vadd.f32 %v133, %v137
    %s139 = scalar_lea.vmem [#allocation9], 3
    %v140 = vld [vmem:[%s139] ss:$4 sm:$0x3]
    %v141 = vstv %s110
    %v142 = vmul.f32 %v141, %v140
    %v143 = vadd.f32 %v138, %v142
    %v144 = vld [vmem:[#allocation6] sm:$0xff]
    %146 = vst [vmem:[#allocation1] ss:$4 sm:$0xff] %v144
    %v147 = vld.sshfl [vmem:[#allocation1] sm:$0xff pattern:$0x73625140]
    %v148 = vld.sshfl [vmem:[#allocation1 + $0x8] sm:$0xff pattern:$0x73625140]
    %v149 = vld.sshfl [vmem:[#allocation1 + $0x10] sm:$0xff pattern:$0x73625140]
    %v150 = vld.sshfl [vmem:[#allocation1 + $0x18] sm:$0xff pattern:$0x73625140]
    %v155 = vpack.c.bf16 %v147, %v147
    %v156 = vpack.c.bf16 %v148, %v148
    %v157 = vpack.c.bf16 %v149, %v149
    %v158 = vpack.c.bf16 %v150, %v150
    %v159 = vld [vmem:[#allocation7] sm:$0xff]
    %v160 = vld [vmem:[#allocation7 + $0x8] sm:$0xff]
    %v161 = vld [vmem:[#allocation7 + $0x10] sm:$0xff]
    %v162 = vld [vmem:[#allocation7 + $0x18] sm:$0xff]
    %v163 = vld [vmem:[#allocation7 + $0x20] sm:$0xff]
    %v164 = vld [vmem:[#allocation7 + $0x28] sm:$0xff]
    %v165 = vld [vmem:[#allocation7 + $0x30] sm:$0xff]
    %v166 = vld [vmem:[#allocation7 + $0x38] sm:$0xff]
    %v167 = vld [vmem:[#allocation7 + $0x40] sm:$0xff]
    %v168 = vld [vmem:[#allocation7 + $0x48] sm:$0xff]
    %v169 = vld [vmem:[#allocation7 + $0x50] sm:$0xff]
    %v170 = vld [vmem:[#allocation7 + $0x58] sm:$0xff]
    %v171 = vld [vmem:[#allocation7 + $0x60] sm:$0xff]
    %v172 = vld [vmem:[#allocation7 + $0x68] sm:$0xff]
    %v173 = vld [vmem:[#allocation7 + $0x70] sm:$0xff]
    %v174 = vld [vmem:[#allocation7 + $0x78] sm:$0xff]
    %v175 = vld [vmem:[#allocation7 + $0x80] sm:$0xff]
    %v176 = vld [vmem:[#allocation7 + $0x88] sm:$0xff]
    %v177 = vld [vmem:[#allocation7 + $0x90] sm:$0xff]
    %v178 = vld [vmem:[#allocation7 + $0x98] sm:$0xff]
    %v179 = vld [vmem:[#allocation7 + $0xa0] sm:$0xff]
    %v180 = vld [vmem:[#allocation7 + $0xa8] sm:$0xff]
    %v181 = vld [vmem:[#allocation7 + $0xb0] sm:$0xff]
    %v182 = vld [vmem:[#allocation7 + $0xb8] sm:$0xff]
    %v183 = vld [vmem:[#allocation7 + $0xc0] sm:$0xff]
    %v184 = vld [vmem:[#allocation7 + $0xc8] sm:$0xff]
    %v185 = vld [vmem:[#allocation7 + $0xd0] sm:$0xff]
    %v186 = vld [vmem:[#allocation7 + $0xd8] sm:$0xff]
    %v187 = vld [vmem:[#allocation7 + $0xe0] sm:$0xff]
    %v188 = vld [vmem:[#allocation7 + $0xe8] sm:$0xff]
    %v189 = vld [vmem:[#allocation7 + $0xf0] sm:$0xff]
    %v190 = vld [vmem:[#allocation7 + $0xf8] sm:$0xff]
    %v191 = vld [vmem:[#allocation7 + $0x100] sm:$0xff]
    %v192 = vld [vmem:[#allocation7 + $0x108] sm:$0xff]
    %v193 = vld [vmem:[#allocation7 + $0x110] sm:$0xff]
    %v194 = vld [vmem:[#allocation7 + $0x118] sm:$0xff]
    %v195 = vld [vmem:[#allocation7 + $0x120] sm:$0xff]
    %v196 = vld [vmem:[#allocation7 + $0x128] sm:$0xff]
    %v197 = vld [vmem:[#allocation7 + $0x130] sm:$0xff]
    %v198 = vld [vmem:[#allocation7 + $0x138] sm:$0xff]
    %v199 = vld [vmem:[#allocation7 + $0x140] sm:$0xff]
    %v200 = vld [vmem:[#allocation7 + $0x148] sm:$0xff]
    %v201 = vld [vmem:[#allocation7 + $0x150] sm:$0xff]
    %v202 = vld [vmem:[#allocation7 + $0x158] sm:$0xff]
    %v203 = vld [vmem:[#allocation7 + $0x160] sm:$0xff]
    %v204 = vld [vmem:[#allocation7 + $0x168] sm:$0xff]
    %v205 = vld [vmem:[#allocation7 + $0x170] sm:$0xff]
    %v206 = vld [vmem:[#allocation7 + $0x178] sm:$0xff]
    %v207 = vld [vmem:[#allocation7 + $0x180] sm:$0xff]
    %v208 = vld [vmem:[#allocation7 + $0x188] sm:$0xff]
    %v209 = vld [vmem:[#allocation7 + $0x190] sm:$0xff]
    %v210 = vld [vmem:[#allocation7 + $0x198] sm:$0xff]
    %v211 = vld [vmem:[#allocation7 + $0x1a0] sm:$0xff]
    %v212 = vld [vmem:[#allocation7 + $0x1a8] sm:$0xff]
    %v213 = vld [vmem:[#allocation7 + $0x1b0] sm:$0xff]
    %v214 = vld [vmem:[#allocation7 + $0x1b8] sm:$0xff]
    %v215 = vld [vmem:[#allocation7 + $0x1c0] sm:$0xff]
    %v216 = vld [vmem:[#allocation7 + $0x1c8] sm:$0xff]
    %v217 = vld [vmem:[#allocation7 + $0x1d0] sm:$0xff]
    %v218 = vld [vmem:[#allocation7 + $0x1d8] sm:$0xff]
    %v219 = vld [vmem:[#allocation7 + $0x1e0] sm:$0xff]
    %v220 = vld [vmem:[#allocation7 + $0x1e8] sm:$0xff]
    %v221 = vld [vmem:[#allocation7 + $0x1f0] sm:$0xff]
    %v222 = vld [vmem:[#allocation7 + $0x1f8] sm:$0xff]
    %v224 = vperm.slane %v143, 0
    %v225 = vperm.slane %v143, 1
    %v292 = vunpack.c.l.b16 %v159
    %v293 = vunpack.c.h.b16 %v159
    %v294 = vunpack.c.l.b16 %v160
    %v295 = vunpack.c.h.b16 %v160
    %v296 = vunpack.c.l.b16 %v161
    %v297 = vunpack.c.h.b16 %v161
    %v298 = vunpack.c.l.b16 %v162
    %v299 = vunpack.c.h.b16 %v162
    %v300 = vunpack.c.l.b16 %v163
    %v301 = vunpack.c.h.b16 %v163
    %v302 = vunpack.c.l.b16 %v164
    %v303 = vunpack.c.h.b16 %v164
    %v304 = vunpack.c.l.b16 %v165
    %v305 = vunpack.c.h.b16 %v165
    %v306 = vunpack.c.l.b16 %v166
    %v307 = vunpack.c.h.b16 %v166
    %v308 = vunpack.c.l.b16 %v167
    %v309 = vunpack.c.h.b16 %v167
    %v310 = vunpack.c.l.b16 %v168
    %v311 = vunpack.c.h.b16 %v168
    %v312 = vunpack.c.l.b16 %v169
    %v313 = vunpack.c.h.b16 %v169
    %v314 = vunpack.c.l.b16 %v170
    %v315 = vunpack.c.h.b16 %v170
    %v316 = vunpack.c.l.b16 %v171
    %v317 = vunpack.c.h.b16 %v171
    %v318 = vunpack.c.l.b16 %v172
    %v319 = vunpack.c.h.b16 %v172
    %v320 = vunpack.c.l.b16 %v173
    %v321 = vunpack.c.h.b16 %v173
    %v322 = vunpack.c.l.b16 %v174
    %v323 = vunpack.c.h.b16 %v174
    %v324 = vunpack.c.l.b16 %v175
    %v325 = vunpack.c.h.b16 %v175
    %v326 = vunpack.c.l.b16 %v176
    %v327 = vunpack.c.h.b16 %v176
    %v328 = vunpack.c.l.b16 %v177
    %v329 = vunpack.c.h.b16 %v177
    %v330 = vunpack.c.l.b16 %v178
    %v331 = vunpack.c.h.b16 %v178
    %v332 = vunpack.c.l.b16 %v179
    %v333 = vunpack.c.h.b16 %v179
    %v334 = vunpack.c.l.b16 %v180
    %v335 = vunpack.c.h.b16 %v180
    %v336 = vunpack.c.l.b16 %v181
    %v337 = vunpack.c.h.b16 %v181
    %v338 = vunpack.c.l.b16 %v182
    %v339 = vunpack.c.h.b16 %v182
    %v340 = vunpack.c.l.b16 %v183
    %v341 = vunpack.c.h.b16 %v183
    %v342 = vunpack.c.l.b16 %v184
    %v343 = vunpack.c.h.b16 %v184
    %v344 = vunpack.c.l.b16 %v185
    %v345 = vunpack.c.h.b16 %v185
    %v346 = vunpack.c.l.b16 %v186
    %v347 = vunpack.c.h.b16 %v186
    %v348 = vunpack.c.l.b16 %v187
    %v349 = vunpack.c.h.b16 %v187
    %v350 = vunpack.c.l.b16 %v188
    %v351 = vunpack.c.h.b16 %v188
    %v352 = vunpack.c.l.b16 %v189
    %v353 = vunpack.c.h.b16 %v189
    %v354 = vunpack.c.l.b16 %v190
    %v355 = vunpack.c.h.b16 %v190
    %v356 = vunpack.c.l.b16 %v191
    %v357 = vunpack.c.h.b16 %v191
    %v358 = vunpack.c.l.b16 %v192
    %v359 = vunpack.c.h.b16 %v192
    %v360 = vunpack.c.l.b16 %v193
    %v361 = vunpack.c.h.b16 %v193
    %v362 = vunpack.c.l.b16 %v194
    %v363 = vunpack.c.h.b16 %v194
    %v364 = vunpack.c.l.b16 %v195
    %v365 = vunpack.c.h.b16 %v195
    %v366 = vunpack.c.l.b16 %v196
    %v367 = vunpack.c.h.b16 %v196
    %v368 = vunpack.c.l.b16 %v197
    %v369 = vunpack.c.h.b16 %v197
    %v370 = vunpack.c.l.b16 %v198
    %v371 = vunpack.c.h.b16 %v198
    %v372 = vunpack.c.l.b16 %v199
    %v373 = vunpack.c.h.b16 %v199
    %v374 = vunpack.c.l.b16 %v200
    %v375 = vunpack.c.h.b16 %v200
    %v376 = vunpack.c.l.b16 %v201
    %v377 = vunpack.c.h.b16 %v201
    %v378 = vunpack.c.l.b16 %v202
    %v379 = vunpack.c.h.b16 %v202
    %v380 = vunpack.c.l.b16 %v203
    %v381 = vunpack.c.h.b16 %v203
    %v382 = vunpack.c.l.b16 %v204
    %v383 = vunpack.c.h.b16 %v204
    %v384 = vunpack.c.l.b16 %v205
    %v385 = vunpack.c.h.b16 %v205
    %v386 = vunpack.c.l.b16 %v206
    %v387 = vunpack.c.h.b16 %v206
    %v388 = vunpack.c.l.b16 %v207
    %v389 = vunpack.c.h.b16 %v207
    %v390 = vunpack.c.l.b16 %v208
    %v391 = vunpack.c.h.b16 %v208
    %v392 = vunpack.c.l.b16 %v209
    %v393 = vunpack.c.h.b16 %v209
    %v394 = vunpack.c.l.b16 %v210
    %v395 = vunpack.c.h.b16 %v210
    %v396 = vunpack.c.l.b16 %v211
    %v397 = vunpack.c.h.b16 %v211
    %v398 = vunpack.c.l.b16 %v212
    %v399 = vunpack.c.h.b16 %v212
    %v400 = vunpack.c.l.b16 %v213
    %v401 = vunpack.c.h.b16 %v213
    %v402 = vunpack.c.l.b16 %v214
    %v403 = vunpack.c.h.b16 %v214
    %v404 = vunpack.c.l.b16 %v215
    %v405 = vunpack.c.h.b16 %v215
    %v406 = vunpack.c.l.b16 %v216
    %v407 = vunpack.c.h.b16 %v216
    %v408 = vunpack.c.l.b16 %v217
    %v409 = vunpack.c.h.b16 %v217
    %v410 = vunpack.c.l.b16 %v218
    %v411 = vunpack.c.h.b16 %v218
    %v412 = vunpack.c.l.b16 %v219
    %v413 = vunpack.c.h.b16 %v219
    %v414 = vunpack.c.l.b16 %v220
    %v415 = vunpack.c.h.b16 %v220
    %v416 = vunpack.c.l.b16 %v221
    %v417 = vunpack.c.h.b16 %v221
    %v418 = vunpack.c.l.b16 %v222
    %v419 = vunpack.c.h.b16 %v222
    %v420 = vpack.c.b16 %v294, %v292
    %v421 = vpack.c.b16 %v295, %v293
    %v422 = vpack.c.b16 %v298, %v296
    %v423 = vpack.c.b16 %v299, %v297
    %v424 = vpack.c.b16 %v302, %v300
    %v425 = vpack.c.b16 %v303, %v301
    %v426 = vpack.c.b16 %v306, %v304
    %v427 = vpack.c.b16 %v307, %v305
    %v428 = vpack.c.b16 %v310, %v308
    %v429 = vpack.c.b16 %v311, %v309
    %v430 = vpack.c.b16 %v314, %v312
    %v431 = vpack.c.b16 %v315, %v313
    %v432 = vpack.c.b16 %v318, %v316
    %v433 = vpack.c.b16 %v319, %v317
    %v434 = vpack.c.b16 %v322, %v320
    %v435 = vpack.c.b16 %v323, %v321
    %v436 = vpack.c.b16 %v326, %v324
    %v437 = vpack.c.b16 %v327, %v325
    %v438 = vpack.c.b16 %v330, %v328
    %v439 = vpack.c.b16 %v331, %v329
    %v440 = vpack.c.b16 %v334, %v332
    %v441 = vpack.c.b16 %v335, %v333
    %v442 = vpack.c.b16 %v338, %v336
    %v443 = vpack.c.b16 %v339, %v337
    %v444 = vpack.c.b16 %v342, %v340
    %v445 = vpack.c.b16 %v343, %v341
    %v446 = vpack.c.b16 %v346, %v344
    %v447 = vpack.c.b16 %v347, %v345
    %v448 = vpack.c.b16 %v350, %v348
    %v449 = vpack.c.b16 %v351, %v349
    %v450 = vpack.c.b16 %v354, %v352
    %v451 = vpack.c.b16 %v355, %v353
    %v452 = vpack.c.b16 %v358, %v356
    %v453 = vpack.c.b16 %v359, %v357
    %v454 = vpack.c.b16 %v362, %v360
    %v455 = vpack.c.b16 %v363, %v361
    %v456 = vpack.c.b16 %v366, %v364
    %v457 = vpack.c.b16 %v367, %v365
    %v458 = vpack.c.b16 %v370, %v368
    %v459 = vpack.c.b16 %v371, %v369
    %v460 = vpack.c.b16 %v374, %v372
    %v461 = vpack.c.b16 %v375, %v373
    %v462 = vpack.c.b16 %v378, %v376
    %v463 = vpack.c.b16 %v379, %v377
    %v464 = vpack.c.b16 %v382, %v380
    %v465 = vpack.c.b16 %v383, %v381
    %v466 = vpack.c.b16 %v386, %v384
    %v467 = vpack.c.b16 %v387, %v385
    %v468 = vpack.c.b16 %v390, %v388
    %v469 = vpack.c.b16 %v391, %v389
    %v470 = vpack.c.b16 %v394, %v392
    %v471 = vpack.c.b16 %v395, %v393
    %v472 = vpack.c.b16 %v398, %v396
    %v473 = vpack.c.b16 %v399, %v397
    %v474 = vpack.c.b16 %v402, %v400
    %v475 = vpack.c.b16 %v403, %v401
    %v476 = vpack.c.b16 %v406, %v404
    %v477 = vpack.c.b16 %v407, %v405
    %v478 = vpack.c.b16 %v410, %v408
    %v479 = vpack.c.b16 %v411, %v409
    %v480 = vpack.c.b16 %v414, %v412
    %v481 = vpack.c.b16 %v415, %v413
    %v482 = vpack.c.b16 %v418, %v416
    %v483 = vpack.c.b16 %v419, %v417
    %548 = vmatpush.bf16.msra.mxu0 %v434
    %549 = vmatpush.bf16.msra.mxu0 %v432
    %550 = vmatpush.bf16.msra.mxu0 %v430
    %551 = vmatpush.bf16.msra.mxu0 %v428
    %552 = vmatpush.bf16.msra.mxu0 %v426
    %553 = vmatpush.bf16.msra.mxu0 %v424
    %554 = vmatpush.bf16.msra.mxu0 %v422
    %555 = vmatpush.bf16.msra.mxu0 %v420
    %556 = vmatmul.bf16.gmra.mxu0 %v155
    %v557 = vpop.f32.mrf.mxu0
    %v558 = vadd.f32 %v224, %v557
    %v559 = vpop.f32.mrf.mxu0
    %560 = vdwg.mxu0
    %561 = vmatpush.bf16.msra.mxu0 %v450
    %562 = vmatpush.bf16.msra.mxu0 %v448
    %563 = vmatpush.bf16.msra.mxu0 %v446
    %564 = vmatpush.bf16.msra.mxu0 %v444
    %565 = vmatpush.bf16.msra.mxu0 %v442
    %566 = vmatpush.bf16.msra.mxu0 %v440
    %567 = vmatpush.bf16.msra.mxu0 %v438
    %568 = vmatpush.bf16.msra.mxu0 %v436
    %569 = vmatmul.bf16.gmra.mxu0 %v156
    %v570 = vpop.f32.mrf.mxu0
    %v571 = vadd.f32 %v558, %v570
    %v572 = vpop.f32.mrf.mxu0
    %573 = vdwg.mxu0
    %574 = vmatpush.bf16.msra.mxu0 %v466
    %575 = vmatpush.bf16.msra.mxu0 %v464
    %576 = vmatpush.bf16.msra.mxu0 %v462
    %577 = vmatpush.bf16.msra.mxu0 %v460
    %578 = vmatpush.bf16.msra.mxu0 %v458
    %579 = vmatpush.bf16.msra.mxu0 %v456
    %580 = vmatpush.bf16.msra.mxu0 %v454
    %581 = vmatpush.bf16.msra.mxu0 %v452
    %582 = vmatmul.bf16.gmra.mxu0 %v157
    %v583 = vpop.f32.mrf.mxu0
    %v584 = vadd.f32 %v571, %v583
    %v585 = vpop.f32.mrf.mxu0
    %586 = vdwg.mxu0
    %587 = vmatpush.bf16.msra.mxu0 %v482
    %588 = vmatpush.bf16.msra.mxu0 %v480
    %589 = vmatpush.bf16.msra.mxu0 %v478
    %590 = vmatpush.bf16.msra.mxu0 %v476
    %591 = vmatpush.bf16.msra.mxu0 %v474
    %592 = vmatpush.bf16.msra.mxu0 %v472
    %593 = vmatpush.bf16.msra.mxu0 %v470
    %594 = vmatpush.bf16.msra.mxu0 %v468
    %595 = vmatmul.bf16.gmra.mxu0 %v158
    %v596 = vpop.f32.mrf.mxu0
    %v597 = vadd.f32 %v584, %v596
    %v598 = vpop.f32.mrf.mxu0
    %599 = vdwg.mxu0
    %600 = vmatpush.bf16.msra.mxu0 %v435
    %601 = vmatpush.bf16.msra.mxu0 %v433
    %602 = vmatpush.bf16.msra.mxu0 %v431
    %603 = vmatpush.bf16.msra.mxu0 %v429
    %604 = vmatpush.bf16.msra.mxu0 %v427
    %605 = vmatpush.bf16.msra.mxu0 %v425
    %606 = vmatpush.bf16.msra.mxu0 %v423
    %607 = vmatpush.bf16.msra.mxu0 %v421
    %608 = vmatmul.bf16.gmra.mxu0 %v155
    %v609 = vpop.f32.mrf.mxu0
    %v610 = vadd.f32 %v225, %v609
    %v611 = vpop.f32.mrf.mxu0
    %612 = vdwg.mxu0
    %613 = vmatpush.bf16.msra.mxu0 %v451
    %614 = vmatpush.bf16.msra.mxu0 %v449
    %615 = vmatpush.bf16.msra.mxu0 %v447
    %616 = vmatpush.bf16.msra.mxu0 %v445
    %617 = vmatpush.bf16.msra.mxu0 %v443
    %618 = vmatpush.bf16.msra.mxu0 %v441
    %619 = vmatpush.bf16.msra.mxu0 %v439
    %620 = vmatpush.bf16.msra.mxu0 %v437
    %621 = vmatmul.bf16.gmra.mxu0 %v156
    %v622 = vpop.f32.mrf.mxu0
    %v623 = vadd.f32 %v610, %v622
    %v624 = vpop.f32.mrf.mxu0
    %625 = vdwg.mxu0
    %626 = vmatpush.bf16.msra.mxu0 %v467
    %627 = vmatpush.bf16.msra.mxu0 %v465
    %628 = vmatpush.bf16.msra.mxu0 %v463
    %629 = vmatpush.bf16.msra.mxu0 %v461
    %630 = vmatpush.bf16.msra.mxu0 %v459
    %631 = vmatpush.bf16.msra.mxu0 %v457
    %632 = vmatpush.bf16.msra.mxu0 %v455
    %633 = vmatpush.bf16.msra.mxu0 %v453
    %634 = vmatmul.bf16.gmra.mxu0 %v157
    %v635 = vpop.f32.mrf.mxu0
    %v636 = vadd.f32 %v623, %v635
    %v637 = vpop.f32.mrf.mxu0
    %638 = vdwg.mxu0
    %639 = vmatpush.bf16.msra.mxu0 %v483
    %640 = vmatpush.bf16.msra.mxu0 %v481
    %641 = vmatpush.bf16.msra.mxu0 %v479
    %642 = vmatpush.bf16.msra.mxu0 %v477
    %643 = vmatpush.bf16.msra.mxu0 %v475
    %644 = vmatpush.bf16.msra.mxu0 %v473
    %645 = vmatpush.bf16.msra.mxu0 %v471
    %646 = vmatpush.bf16.msra.mxu0 %v469
    %647 = vmatmul.bf16.gmra.mxu0 %v158
    %v648 = vpop.f32.mrf.mxu0
    %v649 = vadd.f32 %v636, %v648
    %v650 = vpop.f32.mrf.mxu0
    %651 = vdwg.mxu0
    %v652 = vmax.f32 %v597, 0.0
    %v653 = vmax.f32 %v649, 0.0
    %v654 = vpack.c.bf16 %v652, %v652
    %v655 = vpack.c.bf16 %v653, %v653
    %v656 = vld [vmem:[#allocation10] sm:$0xff]
    %v657 = vld [vmem:[#allocation10 + $0x8] sm:$0xff]
    %v658 = vld [vmem:[#allocation10 + $0x10] sm:$0xff]
    %v659 = vld [vmem:[#allocation10 + $0x18] sm:$0xff]
    %v660 = vld [vmem:[#allocation10 + $0x20] sm:$0xff]
    %v661 = vld [vmem:[#allocation10 + $0x28] sm:$0xff]
    %v662 = vld [vmem:[#allocation10 + $0x30] sm:$0xff]
    %v663 = vld [vmem:[#allocation10 + $0x38] sm:$0xff]
    %v664 = vld [vmem:[#allocation10 + $0x40] sm:$0xff]
    %v665 = vld [vmem:[#allocation10 + $0x48] sm:$0xff]
    %v666 = vld [vmem:[#allocation10 + $0x50] sm:$0xff]
    %v667 = vld [vmem:[#allocation10 + $0x58] sm:$0xff]
    %v668 = vld [vmem:[#allocation10 + $0x60] sm:$0xff]
    %v669 = vld [vmem:[#allocation10 + $0x68] sm:$0xff]
    %v670 = vld [vmem:[#allocation10 + $0x70] sm:$0xff]
    %v671 = vld [vmem:[#allocation10 + $0x78] sm:$0xff]
    %v672 = vld [vmem:[#allocation10 + $0x80] sm:$0xff]
    %v673 = vld [vmem:[#allocation10 + $0x88] sm:$0xff]
    %v674 = vld [vmem:[#allocation10 + $0x90] sm:$0xff]
    %v675 = vld [vmem:[#allocation10 + $0x98] sm:$0xff]
    %v676 = vld [vmem:[#allocation10 + $0xa0] sm:$0xff]
    %v677 = vld [vmem:[#allocation10 + $0xa8] sm:$0xff]
    %v678 = vld [vmem:[#allocation10 + $0xb0] sm:$0xff]
    %v679 = vld [vmem:[#allocation10 + $0xb8] sm:$0xff]
    %v680 = vld [vmem:[#allocation10 + $0xc0] sm:$0xff]
    %v681 = vld [vmem:[#allocation10 + $0xc8] sm:$0xff]
    %v682 = vld [vmem:[#allocation10 + $0xd0] sm:$0xff]
    %v683 = vld [vmem:[#allocation10 + $0xd8] sm:$0xff]
    %v684 = vld [vmem:[#allocation10 + $0xe0] sm:$0xff]
    %v685 = vld [vmem:[#allocation10 + $0xe8] sm:$0xff]
    %v686 = vld [vmem:[#allocation10 + $0xf0] sm:$0xff]
    %v687 = vld [vmem:[#allocation10 + $0xf8] sm:$0xff]
    %v688 = vld [vmem:[#allocation10 + $0x100] sm:$0xff]
    %v689 = vld [vmem:[#allocation10 + $0x108] sm:$0xff]
    %v690 = vld [vmem:[#allocation10 + $0x110] sm:$0xff]
    %v691 = vld [vmem:[#allocation10 + $0x118] sm:$0xff]
    %v692 = vld [vmem:[#allocation10 + $0x120] sm:$0xff]
    %v693 = vld [vmem:[#allocation10 + $0x128] sm:$0xff]
    %v694 = vld [vmem:[#allocation10 + $0x130] sm:$0xff]
    %v695 = vld [vmem:[#allocation10 + $0x138] sm:$0xff]
    %v696 = vld [vmem:[#allocation10 + $0x140] sm:$0xff]
    %v697 = vld [vmem:[#allocation10 + $0x148] sm:$0xff]
    %v698 = vld [vmem:[#allocation10 + $0x150] sm:$0xff]
    %v699 = vld [vmem:[#allocation10 + $0x158] sm:$0xff]
    %v700 = vld [vmem:[#allocation10 + $0x160] sm:$0xff]
    %v701 = vld [vmem:[#allocation10 + $0x168] sm:$0xff]
    %v702 = vld [vmem:[#allocation10 + $0x170] sm:$0xff]
    %v703 = vld [vmem:[#allocation10 + $0x178] sm:$0xff]
    %v704 = vld [vmem:[#allocation10 + $0x180] sm:$0xff]
    %v705 = vld [vmem:[#allocation10 + $0x188] sm:$0xff]
    %v706 = vld [vmem:[#allocation10 + $0x190] sm:$0xff]
    %v707 = vld [vmem:[#allocation10 + $0x198] sm:$0xff]
    %v708 = vld [vmem:[#allocation10 + $0x1a0] sm:$0xff]
    %v709 = vld [vmem:[#allocation10 + $0x1a8] sm:$0xff]
    %v710 = vld [vmem:[#allocation10 + $0x1b0] sm:$0xff]
    %v711 = vld [vmem:[#allocation10 + $0x1b8] sm:$0xff]
    %v712 = vld [vmem:[#allocation10 + $0x1c0] sm:$0xff]
    %v713 = vld [vmem:[#allocation10 + $0x1c8] sm:$0xff]
    %v714 = vld [vmem:[#allocation10 + $0x1d0] sm:$0xff]
    %v715 = vld [vmem:[#allocation10 + $0x1d8] sm:$0xff]
    %v716 = vld [vmem:[#allocation10 + $0x1e0] sm:$0xff]
    %v717 = vld [vmem:[#allocation10 + $0x1e8] sm:$0xff]
    %v718 = vld [vmem:[#allocation10 + $0x1f0] sm:$0xff]
    %v719 = vld [vmem:[#allocation10 + $0x1f8] sm:$0xff]
    %v720 = vld [vmem:[#allocation12] sm:$0xf]
    %v722 = vperm.slane %v720, 0
    %v723 = vperm.slane %v720, 1
    %v724 = vperm.slane %v720, 2
    %v725 = vperm.slane %v720, 3
    %v794 = vunpack.c.l.b16 %v656
    %v795 = vunpack.c.h.b16 %v656
    %v796 = vunpack.c.l.b16 %v657
    %v797 = vunpack.c.h.b16 %v657
    %v798 = vunpack.c.l.b16 %v658
    %v799 = vunpack.c.h.b16 %v658
    %v800 = vunpack.c.l.b16 %v659
    %v801 = vunpack.c.h.b16 %v659
    %v802 = vunpack.c.l.b16 %v660
    %v803 = vunpack.c.h.b16 %v660
    %v804 = vunpack.c.l.b16 %v661
    %v805 = vunpack.c.h.b16 %v661
    %v806 = vunpack.c.l.b16 %v662
    %v807 = vunpack.c.h.b16 %v662
    %v808 = vunpack.c.l.b16 %v663
    %v809 = vunpack.c.h.b16 %v663
    %v810 = vunpack.c.l.b16 %v664
    %v811 = vunpack.c.h.b16 %v664
    %v812 = vunpack.c.l.b16 %v665
    %v813 = vunpack.c.h.b16 %v665
    %v814 = vunpack.c.l.b16 %v666
    %v815 = vunpack.c.h.b16 %v666
    %v816 = vunpack.c.l.b16 %v667
    %v817 = vunpack.c.h.b16 %v667
    %v818 = vunpack.c.l.b16 %v668
    %v819 = vunpack.c.h.b16 %v668
    %v820 = vunpack.c.l.b16 %v669
    %v821 = vunpack.c.h.b16 %v669
    %v822 = vunpack.c.l.b16 %v670
    %v823 = vunpack.c.h.b16 %v670
    %v824 = vunpack.c.l.b16 %v671
    %v825 = vunpack.c.h.b16 %v671
    %v826 = vunpack.c.l.b16 %v672
    %v827 = vunpack.c.h.b16 %v672
    %v828 = vunpack.c.l.b16 %v673
    %v829 = vunpack.c.h.b16 %v673
    %v830 = vunpack.c.l.b16 %v674
    %v831 = vunpack.c.h.b16 %v674
    %v832 = vunpack.c.l.b16 %v675
    %v833 = vunpack.c.h.b16 %v675
    %v834 = vunpack.c.l.b16 %v676
    %v835 = vunpack.c.h.b16 %v676
    %v836 = vunpack.c.l.b16 %v677
    %v837 = vunpack.c.h.b16 %v677
    %v838 = vunpack.c.l.b16 %v678
    %v839 = vunpack.c.h.b16 %v678
    %v840 = vunpack.c.l.b16 %v679
    %v841 = vunpack.c.h.b16 %v679
    %v842 = vunpack.c.l.b16 %v680
    %v843 = vunpack.c.h.b16 %v680
    %v844 = vunpack.c.l.b16 %v681
    %v845 = vunpack.c.h.b16 %v681
    %v846 = vunpack.c.l.b16 %v682
    %v847 = vunpack.c.h.b16 %v682
    %v848 = vunpack.c.l.b16 %v683
    %v849 = vunpack.c.h.b16 %v683
    %v850 = vunpack.c.l.b16 %v684
    %v851 = vunpack.c.h.b16 %v684
    %v852 = vunpack.c.l.b16 %v685
    %v853 = vunpack.c.h.b16 %v685
    %v854 = vunpack.c.l.b16 %v686
    %v855 = vunpack.c.h.b16 %v686
    %v856 = vunpack.c.l.b16 %v687
    %v857 = vunpack.c.h.b16 %v687
    %v858 = vunpack.c.l.b16 %v688
    %v859 = vunpack.c.h.b16 %v688
    %v860 = vunpack.c.l.b16 %v689
    %v861 = vunpack.c.h.b16 %v689
    %v862 = vunpack.c.l.b16 %v690
    %v863 = vunpack.c.h.b16 %v690
    %v864 = vunpack.c.l.b16 %v691
    %v865 = vunpack.c.h.b16 %v691
    %v866 = vunpack.c.l.b16 %v692
    %v867 = vunpack.c.h.b16 %v692
    %v868 = vunpack.c.l.b16 %v693
    %v869 = vunpack.c.h.b16 %v693
    %v870 = vunpack.c.l.b16 %v694
    %v871 = vunpack.c.h.b16 %v694
    %v872 = vunpack.c.l.b16 %v695
    %v873 = vunpack.c.h.b16 %v695
    %v874 = vunpack.c.l.b16 %v696
    %v875 = vunpack.c.h.b16 %v696
    %v876 = vunpack.c.l.b16 %v697
    %v877 = vunpack.c.h.b16 %v697
    %v878 = vunpack.c.l.b16 %v698
    %v879 = vunpack.c.h.b16 %v698
    %v880 = vunpack.c.l.b16 %v699
    %v881 = vunpack.c.h.b16 %v699
    %v882 = vunpack.c.l.b16 %v700
    %v883 = vunpack.c.h.b16 %v700
    %v884 = vunpack.c.l.b16 %v701
    %v885 = vunpack.c.h.b16 %v701
    %v886 = vunpack.c.l.b16 %v702
    %v887 = vunpack.c.h.b16 %v702
    %v888 = vunpack.c.l.b16 %v703
    %v889 = vunpack.c.h.b16 %v703
    %v890 = vunpack.c.l.b16 %v704
    %v891 = vunpack.c.h.b16 %v704
    %v892 = vunpack.c.l.b16 %v705
    %v893 = vunpack.c.h.b16 %v705
    %v894 = vunpack.c.l.b16 %v706
    %v895 = vunpack.c.h.b16 %v706
    %v896 = vunpack.c.l.b16 %v707
    %v897 = vunpack.c.h.b16 %v707
    %v898 = vunpack.c.l.b16 %v708
    %v899 = vunpack.c.h.b16 %v708
    %v900 = vunpack.c.l.b16 %v709
    %v901 = vunpack.c.h.b16 %v709
    %v902 = vunpack.c.l.b16 %v710
    %v903 = vunpack.c.h.b16 %v710
    %v904 = vunpack.c.l.b16 %v711
    %v905 = vunpack.c.h.b16 %v711
    %v906 = vunpack.c.l.b16 %v712
    %v907 = vunpack.c.h.b16 %v712
    %v908 = vunpack.c.l.b16 %v713
    %v909 = vunpack.c.h.b16 %v713
    %v910 = vunpack.c.l.b16 %v714
    %v911 = vunpack.c.h.b16 %v714
    %v912 = vunpack.c.l.b16 %v715
    %v913 = vunpack.c.h.b16 %v715
    %v914 = vunpack.c.l.b16 %v716
    %v915 = vunpack.c.h.b16 %v716
    %v916 = vunpack.c.l.b16 %v717
    %v917 = vunpack.c.h.b16 %v717
    %v918 = vunpack.c.l.b16 %v718
    %v919 = vunpack.c.h.b16 %v718
    %v920 = vunpack.c.l.b16 %v719
    %v921 = vunpack.c.h.b16 %v719
    %v922 = vpack.c.b16 %v798, %v794
    %v923 = vpack.c.b16 %v799, %v795
    %v924 = vpack.c.b16 %v800, %v796
    %v925 = vpack.c.b16 %v801, %v797
    %v926 = vpack.c.b16 %v806, %v802
    %v927 = vpack.c.b16 %v807, %v803
    %v928 = vpack.c.b16 %v808, %v804
    %v929 = vpack.c.b16 %v809, %v805
    %v930 = vpack.c.b16 %v814, %v810
    %v931 = vpack.c.b16 %v815, %v811
    %v932 = vpack.c.b16 %v816, %v812
    %v933 = vpack.c.b16 %v817, %v813
    %v934 = vpack.c.b16 %v822, %v818
    %v935 = vpack.c.b16 %v823, %v819
    %v936 = vpack.c.b16 %v824, %v820
    %v937 = vpack.c.b16 %v825, %v821
    %v938 = vpack.c.b16 %v830, %v826
    %v939 = vpack.c.b16 %v831, %v827
    %v940 = vpack.c.b16 %v832, %v828
    %v941 = vpack.c.b16 %v833, %v829
    %v942 = vpack.c.b16 %v838, %v834
    %v943 = vpack.c.b16 %v839, %v835
    %v944 = vpack.c.b16 %v840, %v836
    %v945 = vpack.c.b16 %v841, %v837
    %v946 = vpack.c.b16 %v846, %v842
    %v947 = vpack.c.b16 %v847, %v843
    %v948 = vpack.c.b16 %v848, %v844
    %v949 = vpack.c.b16 %v849, %v845
    %v950 = vpack.c.b16 %v854, %v850
    %v951 = vpack.c.b16 %v855, %v851
    %v952 = vpack.c.b16 %v856, %v852
    %v953 = vpack.c.b16 %v857, %v853
    %v954 = vpack.c.b16 %v862, %v858
    %v955 = vpack.c.b16 %v863, %v859
    %v956 = vpack.c.b16 %v864, %v860
    %v957 = vpack.c.b16 %v865, %v861
    %v958 = vpack.c.b16 %v870, %v866
    %v959 = vpack.c.b16 %v871, %v867
    %v960 = vpack.c.b16 %v872, %v868
    %v961 = vpack.c.b16 %v873, %v869
    %v962 = vpack.c.b16 %v878, %v874
    %v963 = vpack.c.b16 %v879, %v875
    %v964 = vpack.c.b16 %v880, %v876
    %v965 = vpack.c.b16 %v881, %v877
    %v966 = vpack.c.b16 %v886, %v882
    %v967 = vpack.c.b16 %v887, %v883
    %v968 = vpack.c.b16 %v888, %v884
    %v969 = vpack.c.b16 %v889, %v885
    %v970 = vpack.c.b16 %v894, %v890
    %v971 = vpack.c.b16 %v895, %v891
    %v972 = vpack.c.b16 %v896, %v892
    %v973 = vpack.c.b16 %v897, %v893
    %v974 = vpack.c.b16 %v902, %v898
    %v975 = vpack.c.b16 %v903, %v899
    %v976 = vpack.c.b16 %v904, %v900
    %v977 = vpack.c.b16 %v905, %v901
    %v978 = vpack.c.b16 %v910, %v906
    %v979 = vpack.c.b16 %v911, %v907
    %v980 = vpack.c.b16 %v912, %v908
    %v981 = vpack.c.b16 %v913, %v909
    %v982 = vpack.c.b16 %v918, %v914
    %v983 = vpack.c.b16 %v919, %v915
    %v984 = vpack.c.b16 %v920, %v916
    %v985 = vpack.c.b16 %v921, %v917
    %1050 = vmatpush.bf16.msra.mxu0 %v950
    %1051 = vmatpush.bf16.msra.mxu0 %v946
    %1052 = vmatpush.bf16.msra.mxu0 %v942
    %1053 = vmatpush.bf16.msra.mxu0 %v938
    %1054 = vmatpush.bf16.msra.mxu0 %v934
    %1055 = vmatpush.bf16.msra.mxu0 %v930
    %1056 = vmatpush.bf16.msra.mxu0 %v926
    %1057 = vmatpush.bf16.msra.mxu0 %v922
    %1058 = vmatmul.bf16.gmra.mxu0 %v654
    %v1059 = vpop.f32.mrf.mxu0
    %v1060 = vadd.f32 %v722, %v1059
    %v1061 = vpop.f32.mrf.mxu0
    %1062 = vdwg.mxu0
    %1063 = vmatpush.bf16.msra.mxu0 %v982
    %1064 = vmatpush.bf16.msra.mxu0 %v978
    %1065 = vmatpush.bf16.msra.mxu0 %v974
    %1066 = vmatpush.bf16.msra.mxu0 %v970
    %1067 = vmatpush.bf16.msra.mxu0 %v966
    %1068 = vmatpush.bf16.msra.mxu0 %v962
    %1069 = vmatpush.bf16.msra.mxu0 %v958
    %1070 = vmatpush.bf16.msra.mxu0 %v954
    %1071 = vmatmul.bf16.gmra.mxu0 %v655
    %v1072 = vpop.f32.mrf.mxu0
    %v1073 = vadd.f32 %v1060, %v1072
    %v1074 = vpop.f32.mrf.mxu0
    %1075 = vdwg.mxu0
    %1076 = vmatpush.bf16.msra.mxu0 %v951
    %1077 = vmatpush.bf16.msra.mxu0 %v947
    %1078 = vmatpush.bf16.msra.mxu0 %v943
    %1079 = vmatpush.bf16.msra.mxu0 %v939
    %1080 = vmatpush.bf16.msra.mxu0 %v935
    %1081 = vmatpush.bf16.msra.mxu0 %v931
    %1082 = vmatpush.bf16.msra.mxu0 %v927
    %1083 = vmatpush.bf16.msra.mxu0 %v923
    %1084 = vmatmul.bf16.gmra.mxu0 %v654
    %v1085 = vpop.f32.mrf.mxu0
    %v1086 = vadd.f32 %v723, %v1085
    %v1087 = vpop.f32.mrf.mxu0
    %1088 = vdwg.mxu0
    %1089 = vmatpush.bf16.msra.mxu0 %v983
    %1090 = vmatpush.bf16.msra.mxu0 %v979
    %1091 = vmatpush.bf16.msra.mxu0 %v975
    %1092 = vmatpush.bf16.msra.mxu0 %v971
    %1093 = vmatpush.bf16.msra.mxu0 %v967
    %1094 = vmatpush.bf16.msra.mxu0 %v963
    %1095 = vmatpush.bf16.msra.mxu0 %v959
    %1096 = vmatpush.bf16.msra.mxu0 %v955
    %1097 = vmatmul.bf16.gmra.mxu0 %v655
    %v1098 = vpop.f32.mrf.mxu0
    %v1099 = vadd.f32 %v1086, %v1098
    %v1100 = vpop.f32.mrf.mxu0
    %1101 = vdwg.mxu0
    %1102 = vmatpush.bf16.msra.mxu0 %v952
    %1103 = vmatpush.bf16.msra.mxu0 %v948
    %1104 = vmatpush.bf16.msra.mxu0 %v944
    %1105 = vmatpush.bf16.msra.mxu0 %v940
    %1106 = vmatpush.bf16.msra.mxu0 %v936
    %1107 = vmatpush.bf16.msra.mxu0 %v932
    %1108 = vmatpush.bf16.msra.mxu0 %v928
    %1109 = vmatpush.bf16.msra.mxu0 %v924
    %1110 = vmatmul.bf16.gmra.mxu0 %v654
    %v1111 = vpop.f32.mrf.mxu0
    %v1112 = vadd.f32 %v724, %v1111
    %v1113 = vpop.f32.mrf.mxu0
    %1114 = vdwg.mxu0
    %1115 = vmatpush.bf16.msra.mxu0 %v984
    %1116 = vmatpush.bf16.msra.mxu0 %v980
    %1117 = vmatpush.bf16.msra.mxu0 %v976
    %1118 = vmatpush.bf16.msra.mxu0 %v972
    %1119 = vmatpush.bf16.msra.mxu0 %v968
    %1120 = vmatpush.bf16.msra.mxu0 %v964
    %1121 = vmatpush.bf16.msra.mxu0 %v960
    %1122 = vmatpush.bf16.msra.mxu0 %v956
    %1123 = vmatmul.bf16.gmra.mxu0 %v655
    %v1124 = vpop.f32.mrf.mxu0
    %v1125 = vadd.f32 %v1112, %v1124
    %v1126 = vpop.f32.mrf.mxu0
    %1127 = vdwg.mxu0
    %1128 = vmatpush.bf16.msra.mxu0 %v953
    %1129 = vmatpush.bf16.msra.mxu0 %v949
    %1130 = vmatpush.bf16.msra.mxu0 %v945
    %1131 = vmatpush.bf16.msra.mxu0 %v941
    %1132 = vmatpush.bf16.msra.mxu0 %v937
    %1133 = vmatpush.bf16.msra.mxu0 %v933
    %1134 = vmatpush.bf16.msra.mxu0 %v929
    %1135 = vmatpush.bf16.msra.mxu0 %v925
    %1136 = vmatmul.bf16.gmra.mxu0 %v654
    %v1137 = vpop.f32.mrf.mxu0
    %v1138 = vadd.f32 %v725, %v1137
    %v1139 = vpop.f32.mrf.mxu0
    %1140 = vdwg.mxu0
    %1141 = vmatpush.bf16.msra.mxu0 %v985
    %1142 = vmatpush.bf16.msra.mxu0 %v981
    %1143 = vmatpush.bf16.msra.mxu0 %v977
    %1144 = vmatpush.bf16.msra.mxu0 %v973
    %1145 = vmatpush.bf16.msra.mxu0 %v969
    %1146 = vmatpush.bf16.msra.mxu0 %v965
    %1147 = vmatpush.bf16.msra.mxu0 %v961
    %1148 = vmatpush.bf16.msra.mxu0 %v957
    %1149 = vmatmul.bf16.gmra.mxu0 %v655
    %v1150 = vpop.f32.mrf.mxu0
    %v1151 = vadd.f32 %v1138, %v1150
    %v1152 = vpop.f32.mrf.mxu0
    %1153 = vdwg.mxu0
    %v1154 = vtanh.pop %v1073
    %v1155 = vtanh.pop %v1099
    %v1156 = vtanh.pop %v1125
    %v1157 = vtanh.pop %v1151
    %v1162 = vrot.slane %v1155, 6
    %v1163 = vrot.slane %v1156, 4
    %v1164 = vrot.slane %v1157, 2
    %vm1165 = vcmask 1041408
    %v1166 = vsel %vm1165, %v1154, %v1162
    %vm1167 = vcmask 1045508
    %v1168 = vsel %vm1167, %v1163, %v1164
    %vm1169 = vcmask 1043456
    %v1170 = vsel %vm1169, %v1166, %v1168
    %1172 = vst [vmem:[#allocation13] sm:$0xff] %v1170
    // Predicated region
    $region50: #{plasma_dynamics_forward.1} parent=1 // pred_check
      _
    $region51: #{plasma_dynamics_forward.1} parent=1 // pred_check_branch
      %1174 = sbr.rel (0) target = $region53
    $region52: #{plasma_dynamics_forward.1} parent=1 // pred_region
      %1176 = vsyncadd [#allocation4], 0
      %s1178 = sshll.u32 [#allocation13], 4
      %s1179 = int_to_ptr.vmem [resolvable:$true] %s1178
      %s1180 = sshll.u32 %s6, 4
      %s1181 = int_to_ptr.hbm [resolvable:$true] %s1180
      %1183 = dma.vmem_to_hbm [thread:$0]  %s1179, 128, %s1181, [#allocation4]
    $region53: #{plasma_dynamics_forward.1} parent=1 // pred_fallthru
      _
    // Predicated region
    $region54: #{plasma_dynamics_forward.1} parent=1 // pred_check
      _
    $region55: #{plasma_dynamics_forward.1} parent=1 // pred_check_branch
      %1185 = sbr.rel (0) target = $region57
    $region56: #{plasma_dynamics_forward.1} parent=1 // pred_region
      %1187 = dma.done [#allocation4], 128
    $region57: #{plasma_dynamics_forward.1} parent=1 // pred_fallthru
      _
    %1188 = vsyncpa [#allocation3], 1
    %1189 = vsyncpa [#allocation8], 1
    %1190 = vsyncpa [#allocation11], 1
    %1191 = vsyncpa [#allocation4], 1
    %1192 = vsyncpa [#allocation5], 1

</llo_original>
